<compile_context>
chip_gen: v5e
topology: v5e:2x2
jax: 0.10.0
libtpu: 0.0.40
codegen_flags: <defaults>
</compile_context>

<pallas_src>
import functools

import jax
import jax.numpy as jnp
from jax.experimental import pallas as pl
from jax.experimental.pallas import tpu as pltpu


def _round_up(x, m):
    return (x + m - 1) // m * m


def critic2_kernel(state_ref, action_ref, slab_ref, out_ref, *,
                   sd, ad, out_size, offs):
    """One fused twin-Q pass over a TB-row batch tile.

    Slab layout (all sections lane-padded to P=128 cols, 8-row aligned):
      [off_ws  : +sd]   W1|W4 rows that multiply `state`
      [off_wa  : +ad]   W1|W4 rows that multiply `action`
      [off_b14 : +1 ]   b1|b4
      [off_w25 : +P ]   block_diag(W2, W5)
      [off_b25 : +1 ]   b2|b5
      [off_w36 : +P ]   block_diag(W3, W6)   (cols [0:2*out])
      [off_b36 : +1 ]   b3|b6
    """
    off_ws, off_wa, off_b14, off_w25, off_b25, off_w36, off_b36 = offs

    w_s = slab_ref[off_ws:off_ws + sd, :]
    w_a = slab_ref[off_wa:off_wa + ad, :]
    b14 = slab_ref[off_b14:off_b14 + 1, :]

    # Fused layers 1 & 4; split state/action dots avoid a wrapper-side concat.
    h = (jnp.dot(state_ref[...], w_s, preferred_element_type=jnp.float32)
         + jnp.dot(action_ref[...], w_a, preferred_element_type=jnp.float32)
         + b14)
    h = jnp.maximum(h, 0.0)

    # Fused layers 2 & 5 (block-diagonal weights).
    P = h.shape[1]
    w25 = slab_ref[off_w25:off_w25 + P, :]
    b25 = slab_ref[off_b25:off_b25 + 1, :]
    h = jnp.maximum(
        jnp.dot(h, w25, preferred_element_type=jnp.float32) + b25, 0.0)

    # Fused layers 3 & 6 (block-diagonal): q1 in cols [0:out), q2 in [out:2*out).
    w36 = slab_ref[off_w36:off_w36 + P, :]
    b36 = slab_ref[off_b36:off_b36 + 1, :]
    q = jnp.dot(h, w36, preferred_element_type=jnp.float32) + b36

    out_ref[0, :, :] = q[:, :out_size].astype(out_ref.dtype)
    out_ref[1, :, :] = q[:, out_size:2 * out_size].astype(out_ref.dtype)


def pack_params(params, state_dim):
    """One-time packing of the 6 Linear layers into a single padded weight slab."""
    H = params["w1"].shape[1]
    O = params["w3"].shape[1]
    in_dim = params["w1"].shape[0]
    ad = in_dim - state_dim
    dt = params["w1"].dtype                       # follow params dtype

    P = _round_up(max(2 * H, 2 * O), 128)         # lane-padded fused width

    sd_p = _round_up(state_dim, 8)
    ad_p = _round_up(ad, 8)
    off_ws = 0
    off_wa = off_ws + sd_p
    off_b14 = off_wa + ad_p
    off_w25 = off_b14 + 8
    off_b25 = off_w25 + P
    off_w36 = off_b25 + 8
    off_b36 = off_w36 + P
    rows = off_b36 + 8

    slab = jnp.zeros((rows, P), dt)

    w14 = jnp.concatenate([params["w1"], params["w4"]], axis=1)        # (in, 2H)
    slab = slab.at[off_ws:off_ws + state_dim, :2 * H].set(w14[:state_dim])
    slab = slab.at[off_wa:off_wa + ad, :2 * H].set(w14[state_dim:])
    slab = slab.at[off_b14, :2 * H].set(
        jnp.concatenate([params["b1"], params["b4"]], axis=1)[0])

    z_hh = jnp.zeros((H, H), dt)
    w25 = jnp.block([[params["w2"], z_hh], [z_hh, params["w5"]]])      # (2H, 2H)
    slab = slab.at[off_w25:off_w25 + 2 * H, :2 * H].set(w25)
    slab = slab.at[off_b25, :2 * H].set(
        jnp.concatenate([params["b2"], params["b5"]], axis=1)[0])

    z_ho = jnp.zeros((H, O), dt)
    w36 = jnp.block([[params["w3"], z_ho], [z_ho, params["w6"]]])      # (2H, 2O)
    slab = slab.at[off_w36:off_w36 + 2 * H, :2 * O].set(w36)
    slab = slab.at[off_b36, :2 * O].set(
        jnp.concatenate([params["b3"], params["b6"]], axis=1)[0])

    meta = dict(state_dim=state_dim, action_dim=ad, hidden=H, out=O, P=P,
                offs=(off_ws, off_wa, off_b14, off_w25, off_b25, off_w36, off_b36))
    return slab, meta


def critic2_forward(state, action, slab, meta, *, batch_tile=None):
    """Returns (q1, q2), each (B, output_size)."""
    B = state.shape[0]
    sd = meta["state_dim"]
    ad = meta["action_dim"]
    O = meta["out"]

    # Batch tile: one grid step at small B; up to 512-row tiles at large B so
    # the launch amortizes (and the parallel grid axis uses both v7x TCs).
    if batch_tile is None:
        batch_tile = min(_round_up(B, 8), 512)
    TB = batch_tile
    BP = _round_up(B, TB)
    if BP != B:
        pad = BP - B
        state = jnp.pad(state, ((0, pad), (0, 0)))
        action = jnp.pad(action, ((0, pad), (0, 0)))
    grid = (BP // TB,)

    kernel = functools.partial(critic2_kernel, sd=sd, ad=ad, out_size=O,
                               offs=meta["offs"])
    rows, P = slab.shape

    out = pl.pallas_call(
        kernel,
        grid=grid,
        in_specs=[
            pl.BlockSpec((TB, sd), lambda i: (i, 0)),
            pl.BlockSpec((TB, ad), lambda i: (i, 0)),
            # Constant index_map -> the ~155 KiB weight slab stays resident in
            # VMEM across the whole batch grid (no per-step re-fetch).
            pl.BlockSpec((rows, P), lambda i: (0, 0)),
        ],
        out_specs=pl.BlockSpec((2, TB, O), lambda i: (0, i, 0)),
        out_shape=jax.ShapeDtypeStruct((2, BP, O), jnp.float32),
        compiler_params=pltpu.CompilerParams(
            dimension_semantics=("parallel",)),
    )(state, action, slab)

    return out[0, :B, :], out[1, :B, :]


def init_params(key, input_size, hidden_size, output_size):
    """Init mimicking nn.Linear's U(-1/sqrt(fan_in), 1/sqrt(fan_in)).

    Weights stored as (in_features, out_features) (transposed vs PyTorch)."""
    dims = [(input_size, hidden_size), (hidden_size, hidden_size),
            (hidden_size, output_size),
            (input_size, hidden_size), (hidden_size, hidden_size),
            (hidden_size, output_size)]
    params = {}
    for i, (fan_in, fan_out) in enumerate(dims, start=1):
        key, kw, kb = jax.random.split(key, 3)
        bound = 1.0 / (fan_in ** 0.5)
        params[f"w{i}"] = jax.random.uniform(
            kw, (fan_in, fan_out), jnp.float32, -bound, bound)
        params[f"b{i}"] = jax.random.uniform(
            kb, (1, fan_out), jnp.float32, -bound, bound)
    return params


def critic2_reference(state, action, params):
    """Pure-JAX reference mirroring the original PyTorch forward."""
    sa = jnp.concatenate([state, action], axis=1)
    h = jax.nn.relu(sa @ params["w1"] + params["b1"])
    h = jax.nn.relu(h @ params["w2"] + params["b2"])
    x = h @ params["w3"] + params["b3"]
    g = jax.nn.relu(sa @ params["w4"] + params["b4"])
    g = jax.nn.relu(g @ params["w5"] + params["b5"])
    y = g @ params["w6"] + params["b6"]
    return x, y


if __name__ == "__main__":
    key = jax.random.PRNGKey(0)

    batch = 8
    state_dim = 12
    action_dim = 4
    input_size = state_dim + action_dim   # 16
    hidden_size = 32
    output_size = 1

    key, ks, ka, kp = jax.random.split(key, 4)
    state = jax.random.normal(ks, (batch, state_dim), jnp.float32)
    action = jax.random.normal(ka, (batch, action_dim), jnp.float32)
    params = init_params(kp, input_size, hidden_size, output_size)

    slab, meta = pack_params(params, state_dim)     # one-time weight packing
    slab = jax.block_until_ready(slab)

    q1, q2 = critic2_forward(state, action, slab, meta)
    jax.block_until_ready((q1, q2))

    # Correctness check against the pure-JAX reference of the original module.
    x_ref, y_ref = critic2_reference(state, action, params)
    assert q1.shape == (batch, output_size) and q2.shape == (batch, output_size)
    assert jnp.allclose(q1, x_ref, atol=1e-5, rtol=1e-5)
    assert jnp.allclose(q2, y_ref, atol=1e-5, rtol=1e-5)

    print("KERNEL_OK")
</pallas_src>

<mosaic_0001>
module attributes {stable_mosaic.version = 11 : i64} {
  func.func @critic2_kernel(%arg0: i32, %arg1: memref<8x12xf32, #tpu.memory_space<vmem>>, %arg2: memref<8x4xf32, #tpu.memory_space<vmem>>, %arg3: memref<304x128xf32, #tpu.memory_space<vmem>>, %arg4: memref<2x8x1xf32, #tpu.memory_space<vmem>>) attributes {dimension_semantics = [#tpu.dimension_semantics<parallel>], iteration_bounds = array<i64: 1>, scalar_prefetch = 0 : i64, scratch_operands = 0 : i64, tpu.core_type = #tpu.core_type<tc>, window_params = [{transform_indices = @transform_0, window_bounds = array<i64: 8, 12>}, {transform_indices = @transform_1, window_bounds = array<i64: 8, 4>}, {pipeline_mode = #tpu.pipeline_mode<synchronous>, transform_indices = @transform_2, window_bounds = array<i64: 304, 128>}, {transform_indices = @transform_3, window_bounds = array<i64: 2, 8, 1>}]} {
    %c0 = arith.constant 0 : index
    %c0_0 = arith.constant 0 : index
    %0 = vector.load %arg3[%c0, %c0_0] : memref<304x128xf32, #tpu.memory_space<vmem>>, vector<12x128xf32>
    %c16 = arith.constant 16 : index
    %c0_1 = arith.constant 0 : index
    %1 = vector.load %arg3[%c16, %c0_1] : memref<304x128xf32, #tpu.memory_space<vmem>>, vector<4x128xf32>
    %c24 = arith.constant 24 : index
    %c0_2 = arith.constant 0 : index
    %2 = vector.load %arg3[%c24, %c0_2] : memref<304x128xf32, #tpu.memory_space<vmem>>, vector<1x128xf32>
    %c0_3 = arith.constant 0 : index
    %c0_4 = arith.constant 0 : index
    %3 = vector.load %arg1[%c0_3, %c0_4] : memref<8x12xf32, #tpu.memory_space<vmem>>, vector<8x12xf32>
    %cst = arith.constant dense<0.000000e+00> : vector<8x128xf32>
    %4 = tpu.matmul %3, %0, %cst {dimension_numbers = #tpu.dot_dimension_numbers<[1], [0], [0], [1], [0, 0, 1, 1], [], []>} : vector<8x12xf32>, vector<12x128xf32>, vector<8x128xf32> -> vector<8x128xf32>
    %c0_5 = arith.constant 0 : index
    %c0_6 = arith.constant 0 : index
    %5 = vector.load %arg2[%c0_5, %c0_6] : memref<8x4xf32, #tpu.memory_space<vmem>>, vector<8x4xf32>
    %cst_7 = arith.constant dense<0.000000e+00> : vector<8x128xf32>
    %6 = tpu.matmul %5, %1, %cst_7 {dimension_numbers = #tpu.dot_dimension_numbers<[1], [0], [0], [1], [0, 0, 1, 1], [], []>} : vector<8x4xf32>, vector<4x128xf32>, vector<8x128xf32> -> vector<8x128xf32>
    %7 = arith.addf %4, %6 : vector<8x128xf32>
    %8 = vector.broadcast %2 : vector<1x128xf32> to vector<8x128xf32>
    %9 = arith.addf %7, %8 : vector<8x128xf32>
    %cst_8 = arith.constant 0.000000e+00 : f32
    %10 = vector.broadcast %cst_8 : f32 to vector<8x128xf32>
    %11 = arith.maximumf %9, %10 : vector<8x128xf32>
    %c32 = arith.constant 32 : index
    %c0_9 = arith.constant 0 : index
    %12 = vector.load %arg3[%c32, %c0_9] : memref<304x128xf32, #tpu.memory_space<vmem>>, vector<128x128xf32>
    %c160 = arith.constant 160 : index
    %c0_10 = arith.constant 0 : index
    %13 = vector.load %arg3[%c160, %c0_10] : memref<304x128xf32, #tpu.memory_space<vmem>>, vector<1x128xf32>
    %cst_11 = arith.constant dense<0.000000e+00> : vector<8x128xf32>
    %14 = tpu.matmul %11, %12, %cst_11 {dimension_numbers = #tpu.dot_dimension_numbers<[1], [0], [0], [1], [0, 0, 1, 1], [], []>} : vector<8x128xf32>, vector<128x128xf32>, vector<8x128xf32> -> vector<8x128xf32>
    %15 = vector.broadcast %13 : vector<1x128xf32> to vector<8x128xf32>
    %16 = arith.addf %14, %15 : vector<8x128xf32>
    %cst_12 = arith.constant 0.000000e+00 : f32
    %17 = vector.broadcast %cst_12 : f32 to vector<8x128xf32>
    %18 = arith.maximumf %16, %17 : vector<8x128xf32>
    %c168 = arith.constant 168 : index
    %c0_13 = arith.constant 0 : index
    %19 = vector.load %arg3[%c168, %c0_13] : memref<304x128xf32, #tpu.memory_space<vmem>>, vector<128x128xf32>
    %c296 = arith.constant 296 : index
    %c0_14 = arith.constant 0 : index
    %20 = vector.load %arg3[%c296, %c0_14] : memref<304x128xf32, #tpu.memory_space<vmem>>, vector<1x128xf32>
    %cst_15 = arith.constant dense<0.000000e+00> : vector<8x128xf32>
    %21 = tpu.matmul %18, %19, %cst_15 {dimension_numbers = #tpu.dot_dimension_numbers<[1], [0], [0], [1], [0, 0, 1, 1], [], []>} : vector<8x128xf32>, vector<128x128xf32>, vector<8x128xf32> -> vector<8x128xf32>
    %22 = vector.broadcast %20 : vector<1x128xf32> to vector<8x128xf32>
    %23 = arith.addf %21, %22 : vector<8x128xf32>
    %24 = vector.extract_strided_slice %23 {offsets = [0, 0], sizes = [8, 1], strides = [1, 1]} : vector<8x128xf32> to vector<8x1xf32>
    %c0_16 = arith.constant 0 : index
    %c0_17 = arith.constant 0 : index
    %c0_18 = arith.constant 0 : index
    %25 = vector.load %arg4[%c0_16, %c0_17, %c0_18] : memref<2x8x1xf32, #tpu.memory_space<vmem>>, vector<1x8x1xf32>
    %26 = vector.shape_cast %25 : vector<1x8x1xf32> to vector<8x1xf32>
    %27 = vector.shape_cast %24 : vector<8x1xf32> to vector<1x8x1xf32>
    tpu.vector_store %arg4[%c0_16, %c0_17, %c0_18], %27 {strides = array<i32>} : memref<2x8x1xf32, #tpu.memory_space<vmem>>, vector<1x8x1xf32>,
    %28 = vector.extract_strided_slice %23 {offsets = [0, 1], sizes = [8, 1], strides = [1, 1]} : vector<8x128xf32> to vector<8x1xf32>
    %c1 = arith.constant 1 : index
    %c0_19 = arith.constant 0 : index
    %c0_20 = arith.constant 0 : index
    %29 = vector.load %arg4[%c1, %c0_19, %c0_20] : memref<2x8x1xf32, #tpu.memory_space<vmem>>, vector<1x8x1xf32>
    %30 = vector.shape_cast %29 : vector<1x8x1xf32> to vector<8x1xf32>
    %31 = vector.shape_cast %28 : vector<8x1xf32> to vector<1x8x1xf32>
    tpu.vector_store %arg4[%c1, %c0_19, %c0_20], %31 {strides = array<i32>} : memref<2x8x1xf32, #tpu.memory_space<vmem>>, vector<1x8x1xf32>,
    return
  }
  func.func @transform_0(%arg0: i32) -> (i32, i32) {
    %c0_i32 = arith.constant 0 : i32
    %c0_i32_0 = arith.constant 0 : i32
    return %arg0, %c0_i32 : i32, i32
  }
  func.func @transform_1(%arg0: i32) -> (i32, i32) {
    %c0_i32 = arith.constant 0 : i32
    %c0_i32_0 = arith.constant 0 : i32
    return %arg0, %c0_i32 : i32, i32
  }
  func.func @transform_2(%arg0: i32) -> (i32, i32) {
    %c0_i32 = arith.constant 0 : i32
    %c0_i32_0 = arith.constant 0 : i32
    %c0_i32_1 = arith.constant 0 : i32
    return %c0_i32, %c0_i32_0 : i32, i32
  }
  func.func @transform_3(%arg0: i32) -> (i32, i32, i32) {
    %c0_i32 = arith.constant 0 : i32
    %c0_i32_0 = arith.constant 0 : i32
    %c0_i32_1 = arith.constant 0 : i32
    return %c0_i32, %arg0, %c0_i32_0 : i32, i32, i32
  }
}

</mosaic_0001>

<llo_original>
// kernel: tpu_custom_call.1
$region0: #{tpu_custom_call.1}
  #allocation0 [shape = 'u32[]', space=smem, size = 0x4, offset = 0x4, fixed_abs, tag = 'smem constant byte address 0x4 - core index']
  #allocation1 [shape = 'u32[72,128]{1,0:T(1,128)}', space=vmem, size = 0x9000, scoped, tag = 'internal scratch']
  %s0 = inlined_call_operand.vmem [shape: f32[8,12], index: 0, kind: input, shape index: {}]
  %s1 = inlined_call_operand.vmem [shape: f32[8,4], index: 1, kind: input, shape index: {}]
  %s2 = inlined_call_operand.hbm [shape: f32[304,128], index: 2, kind: input, shape index: {}]
  %s3 = inlined_call_operand.vmem [shape: f32[2,8,1], index: 3, kind: output, shape index: {}]
  %s4 = sld [smem:[#allocation0]]
  $region26: #{tpu_custom_call.1} parent=0
    _
  %s6 = ssub.s32 1, %s4
  %s7 = scalar_select 0, %s6, %s4
  $region1: #{tpu_custom_call.1} parent=0
    #allocation2 [shape = 'u8[155648]{0}', space=vmem, size = 0x26000, scoped, tag = 'input window, operand 2, single buffered']
    #allocation3 [shape = 's32[1]{0}', space=sflag, size = 0x4, scoped, tag = 'scoped memory for tpu_custom_call.1']
    %8 = vsyncpa [#allocation3], 0
    // Predicated region
    $region2: #{tpu_custom_call.1} parent=1 // pred_check
      _
    $region3: #{tpu_custom_call.1} parent=1 // pred_check_branch
      %10 = sbr.rel (0) target = $region5
    $region4: #{tpu_custom_call.1} parent=1 // pred_region
      _
    $region5: #{tpu_custom_call.1} parent=1 // pred_fallthru
      _
    // Predicated region
    $region6: #{tpu_custom_call.1} parent=1 // pred_check
      _
    $region7: #{tpu_custom_call.1} parent=1 // pred_check_branch
      %12 = sbr.rel (0) target = $region9
    $region8: #{tpu_custom_call.1} parent=1 // pred_region
      _
    $region9: #{tpu_custom_call.1} parent=1 // pred_fallthru
      _
    // Predicated region
    $region10: #{tpu_custom_call.1} parent=1 // pred_check
      _
    $region11: #{tpu_custom_call.1} parent=1 // pred_check_branch
      %14 = sbr.rel (0) target = $region13
    $region12: #{tpu_custom_call.1} parent=1 // pred_region
      %16 = vsyncadd [#allocation3], 0
      %s17 = sshll.u32 %s2, 4
      %s18 = int_to_ptr.hbm [resolvable:$true] %s17
      %s19 = sshll.u32 [#allocation2], 4
      %s20 = int_to_ptr.vmem [resolvable:$true] %s19
      %25 = dma.hbm_to_vmem [thread:$0]  %s18, 4864, %s20, [#allocation3], 128, 128, 8
    $region13: #{tpu_custom_call.1} parent=1 // pred_fallthru
      _
    // Predicated region
    $region14: #{tpu_custom_call.1} parent=1 // pred_check
      _
    $region15: #{tpu_custom_call.1} parent=1 // pred_check_branch
      %27 = sbr.rel (0) target = $region17
    $region16: #{tpu_custom_call.1} parent=1 // pred_region
      %29 = dma.done [#allocation3], 4864
    $region17: #{tpu_custom_call.1} parent=1 // pred_fallthru
      _
    %v30 = vld [vmem:[#allocation2] sm:$0xff]
    %v31 = vld [vmem:[#allocation2 + $0x8] sm:$0xf]
    %v32 = vld [vmem:[#allocation2 + $0x10] sm:$0xf]
    %v33 = vld [vmem:[#allocation2 + $0x18] sm:$0x1]
    %v34 = vld [vmem:[%s0] sm:$0xff]
    %v35 = vld [vmem:[%s1] sm:$0xff]
    %vm36 = vcmask 31744
    %v38 = vsel %vm36, %v35, 0
    %vm40 = vcmask 1043456
    %v42 = vsel %vm40, %v32, 0
    %44 = vmatpush.msra.mxu0 0.0
    %45 = vmatpush.msra.mxu0 0.0
    %46 = vmatpush.msra.mxu0 0.0
    %47 = vmatpush.msra.mxu0 0.0
    %48 = vmatpush.msra.mxu0 0.0
    %49 = vmatpush.msra.mxu0 0.0
    %50 = vmatpush.msra.mxu0 0.0
    %51 = vmatpush.msra.mxu0 0.0
    %52 = vmatpush.msra.mxu0 0.0
    %53 = vmatpush.msra.mxu0 0.0
    %54 = vmatpush.msra.mxu0 0.0
    %55 = vmatpush.msra.mxu0 0.0
    %56 = vmatpush.msra.mxu0 0.0
    %57 = vmatpush.msra.mxu0 0.0
    %58 = vmatpush.msra.mxu0 0.0
    %59 = vmatpush.msra.mxu0 %v42
    %60 = vmatmul.f32.gmra.mxu0 %v38
    %v61 = vpop.f32.mrf.mxu0
    %v62 = vadd.f32 0.0, %v61
    %63 = vdwg.mxu0
    %vm64 = vcmask 97280
    %v66 = vsel %vm64, %v34, 0
    %v69 = vsel %vm40, %v31, 0
    %71 = vmatpush.msra.mxu0 0.0
    %72 = vmatpush.msra.mxu0 0.0
    %73 = vmatpush.msra.mxu0 0.0
    %74 = vmatpush.msra.mxu0 0.0
    %75 = vmatpush.msra.mxu0 0.0
    %76 = vmatpush.msra.mxu0 0.0
    %77 = vmatpush.msra.mxu0 0.0
    %78 = vmatpush.msra.mxu0 0.0
    %79 = vmatpush.msra.mxu0 0.0
    %80 = vmatpush.msra.mxu0 0.0
    %81 = vmatpush.msra.mxu0 0.0
    %82 = vmatpush.msra.mxu0 0.0
    %83 = vmatpush.msra.mxu0 0.0
    %84 = vmatpush.msra.mxu0 0.0
    %85 = vmatpush.msra.mxu0 %v69
    %86 = vmatpush.msra.mxu0 %v30
    %87 = vmatmul.f32.gmra.mxu0 %v66
    %v88 = vpop.f32.mrf.mxu0
    %v89 = vadd.f32 %v62, %v88
    %90 = vdwg.mxu0
    %v91 = vperm.slane %v33, 0
    %v92 = vadd.f32 %v89, %v91
    %v93 = vmax.f32 %v92, 0.0
    %v94 = vld [vmem:[#allocation2 + $0x20] sm:$0xff]
    %v95 = vld [vmem:[#allocation2 + $0x28] sm:$0xff]
    %v96 = vld [vmem:[#allocation2 + $0x30] sm:$0xff]
    %v97 = vld [vmem:[#allocation2 + $0x38] sm:$0xff]
    %v98 = vld [vmem:[#allocation2 + $0x40] sm:$0xff]
    %v99 = vld [vmem:[#allocation2 + $0x48] sm:$0xff]
    %v100 = vld [vmem:[#allocation2 + $0x50] sm:$0xff]
    %v101 = vld [vmem:[#allocation2 + $0x58] sm:$0xff]
    %v102 = vld [vmem:[#allocation2 + $0x60] sm:$0xff]
    %v103 = vld [vmem:[#allocation2 + $0x68] sm:$0xff]
    %v104 = vld [vmem:[#allocation2 + $0x70] sm:$0xff]
    %v105 = vld [vmem:[#allocation2 + $0x78] sm:$0xff]
    %v106 = vld [vmem:[#allocation2 + $0x80] sm:$0xff]
    %v107 = vld [vmem:[#allocation2 + $0x88] sm:$0xff]
    %v108 = vld [vmem:[#allocation2 + $0x90] sm:$0xff]
    %v109 = vld [vmem:[#allocation2 + $0x98] sm:$0xff]
    %v110 = vld [vmem:[#allocation2 + $0xa0] sm:$0x1]
    %v111 = vperm.slane %v110, 0
    %112 = vmatpush.msra.mxu0 %v109
    %113 = vmatpush.msra.mxu0 %v108
    %114 = vmatpush.msra.mxu0 %v107
    %115 = vmatpush.msra.mxu0 %v106
    %116 = vmatpush.msra.mxu0 %v105
    %117 = vmatpush.msra.mxu0 %v104
    %118 = vmatpush.msra.mxu0 %v103
    %119 = vmatpush.msra.mxu0 %v102
    %120 = vmatpush.msra.mxu0 %v101
    %121 = vmatpush.msra.mxu0 %v100
    %122 = vmatpush.msra.mxu0 %v99
    %123 = vmatpush.msra.mxu0 %v98
    %124 = vmatpush.msra.mxu0 %v97
    %125 = vmatpush.msra.mxu0 %v96
    %126 = vmatpush.msra.mxu0 %v95
    %127 = vmatpush.msra.mxu0 %v94
    %128 = vmatmul.f32.gmra.mxu0 %v93
    %v129 = vpop.f32.mrf.mxu0
    %v130 = vadd.f32 %v111, %v129
    %131 = vdwg.mxu0
    %v132 = vmax.f32 %v130, 0.0
    %v133 = vld [vmem:[#allocation2 + $0xa8] sm:$0xff]
    %v134 = vld [vmem:[#allocation2 + $0xb0] sm:$0xff]
    %v135 = vld [vmem:[#allocation2 + $0xb8] sm:$0xff]
    %v136 = vld [vmem:[#allocation2 + $0xc0] sm:$0xff]
    %v137 = vld [vmem:[#allocation2 + $0xc8] sm:$0xff]
    %v138 = vld [vmem:[#allocation2 + $0xd0] sm:$0xff]
    %v139 = vld [vmem:[#allocation2 + $0xd8] sm:$0xff]
    %v140 = vld [vmem:[#allocation2 + $0xe0] sm:$0xff]
    %v141 = vld [vmem:[#allocation2 + $0xe8] sm:$0xff]
    %v142 = vld [vmem:[#allocation2 + $0xf0] sm:$0xff]
    %v143 = vld [vmem:[#allocation2 + $0xf8] sm:$0xff]
    %v144 = vld [vmem:[#allocation2 + $0x100] sm:$0xff]
    %v145 = vld [vmem:[#allocation2 + $0x108] sm:$0xff]
    %v146 = vld [vmem:[#allocation2 + $0x110] sm:$0xff]
    %v147 = vld [vmem:[#allocation2 + $0x118] sm:$0xff]
    %v148 = vld [vmem:[#allocation2 + $0x120] sm:$0xff]
    %v149 = vld [vmem:[#allocation2 + $0x128] sm:$0x1]
    %v150 = vperm.slane %v149, 0
    %151 = vmatpush.msra.mxu0 %v148
    %152 = vmatpush.msra.mxu0 %v147
    %153 = vmatpush.msra.mxu0 %v146
    %154 = vmatpush.msra.mxu0 %v145
    %155 = vmatpush.msra.mxu0 %v144
    %156 = vmatpush.msra.mxu0 %v143
    %157 = vmatpush.msra.mxu0 %v142
    %158 = vmatpush.msra.mxu0 %v141
    %159 = vmatpush.msra.mxu0 %v140
    %160 = vmatpush.msra.mxu0 %v139
    %161 = vmatpush.msra.mxu0 %v138
    %162 = vmatpush.msra.mxu0 %v137
    %163 = vmatpush.msra.mxu0 %v136
    %164 = vmatpush.msra.mxu0 %v135
    %165 = vmatpush.msra.mxu0 %v134
    %166 = vmatpush.msra.mxu0 %v133
    %167 = vmatmul.f32.gmra.mxu0 %v132
    %v168 = vpop.f32.mrf.mxu0
    %v169 = vadd.f32 %v150, %v168
    %170 = vdwg.mxu0
    %vm171 = vcmask 7168
    %172 = vst.msk [vmem:[%s3] sm:$0xff] %vm171, %v169
    %174 = vrot.lane.b32.xlu0 %v169, 127
    %v175 = vpop.permute.xlu0 %174
    %s177 = scalar_lea.vmem %s3, 8
    %178 = vst.msk [vmem:[%s177] sm:$0xff] %vm171, %v175
    // Predicated region
    $region18: #{tpu_custom_call.1} parent=1 // pred_check
      _
    $region19: #{tpu_custom_call.1} parent=1 // pred_check_branch
      %180 = sbr.rel (0) target = $region21
    $region20: #{tpu_custom_call.1} parent=1 // pred_region
      _
    $region21: #{tpu_custom_call.1} parent=1 // pred_fallthru
      _
    // Predicated region
    $region22: #{tpu_custom_call.1} parent=1 // pred_check
      _
    $region23: #{tpu_custom_call.1} parent=1 // pred_check_branch
      %182 = sbr.rel (0) target = $region25
    $region24: #{tpu_custom_call.1} parent=1 // pred_region
      _
    $region25: #{tpu_custom_call.1} parent=1 // pred_fallthru
      _
    %183 = vsyncpa [#allocation3], 1

</llo_original>
